<compile_context>
chip_gen: v6e
topology: v6e:2x2x1
jax: 0.10.0
libtpu: 0.0.40
codegen_flags: <defaults>
</compile_context>

<pallas_src>
import jax
import jax.numpy as jnp
from jax.experimental import pallas as pl
from jax.experimental.pallas import tpu as pltpu


def _bilinear_decoder_kernel(ctxb_ref, embt_ref, out_ref):
    # ctxb_ref : (N, E)   context @ B.weight, resident across the whole grid
    # embt_ref : (E, T)   transposed embedding tile (items on the lane dim)
    # out_ref  : (N, T)   similarity-score tile (items on the lane dim)
    out_ref[...] = jnp.dot(
        ctxb_ref[...], embt_ref[...],
        preferred_element_type=jnp.float32,
    ).astype(out_ref.dtype)


def bilinear_decoder(context, b_weight, emb_weight, *, tile_ni=32768,
                     apply_softmax=False, emb_stream_dtype=None):
    """context: (N, H), b_weight: (H, E) [PyTorch Linear layout], emb_weight: (NI, E) -> (N, NI).

    emb_stream_dtype: optionally stream the embedding table in a narrower dtype
    (e.g. jnp.bfloat16) to halve the dominant HBM read; accumulation stays f32.
    """
    N, H = context.shape
    NI, E = emb_weight.shape
    assert b_weight.shape == (H, E)

    # Hoist B into the context: one tiny (N,H)x(H,E) matmul in plain JAX.
    ctx_b = jnp.dot(context, b_weight,
                    preferred_element_type=jnp.float32).astype(jnp.float32)  # (N, E)

    # Items-minor layout for the streamed operand: (E, NI). In production the
    # table should simply be stored this way; the one-off transpose here is
    # outside the per-tile hot path.
    emb_t = emb_weight.T
    if emb_stream_dtype is not None:
        emb_t = emb_t.astype(emb_stream_dtype)

    # Large, lane-dense item tile (multiple of 128), capped by the lane-padded
    # vocabulary size. No padding of the table: grid uses cdiv and Pallas masks
    # the ragged last block on the output write.
    padded_to_lanes = pl.cdiv(NI, 128) * 128
    tile = max(128, min(int(tile_ni), padded_to_lanes))
    tile = (tile // 128) * 128

    emb_bytes = emb_t.dtype.itemsize
    ctx_bytes = ctx_b.dtype.itemsize
    out_bytes = jnp.dtype(jnp.float32).itemsize

    # Physical-VMEM-aware budget (v7x: 64 MiB physical; v5e/v6e: 128 MiB).
    try:
        phys_vmem = int(pltpu.get_tpu_info().vmem_capacity_bytes)
    except Exception:  # be conservative if the query is unavailable
        phys_vmem = 64 << 20
    vmem_cap = int(phys_vmem * 0.75)  # headroom under the physical capacity

    def _vmem_need(t):
        # double-buffered emb tile + double-buffered out tile + resident ctx_b
        return (2 * E * t * emb_bytes
                + 2 * N * t * out_bytes
                + 2 * N * E * ctx_bytes)

    # Safety net: shrink the item tile if the pipeline would not fit VMEM
    # (only relevant for very large N; at small N tiles stay large).
    # TODO(synk): for N >> a few hundred, add a parallel N grid axis instead.
    while tile > 128 and _vmem_need(tile) > vmem_cap:
        tile = max(128, ((tile // 2) // 128) * 128)

    grid = (pl.cdiv(NI, tile),)
    vmem_limit = int(min(vmem_cap, max(32 << 20, int(_vmem_need(tile) * 1.5))))

    # Advisory cost hint for the XLA scheduler (kernel is HBM-bound).
    cost = pl.CostEstimate(
        flops=2 * N * E * NI,
        transcendentals=0,
        bytes_accessed=(NI * E * emb_bytes
                        + N * E * ctx_bytes
                        + N * NI * out_bytes),
    )

    out = pl.pallas_call(
        _bilinear_decoder_kernel,
        out_shape=jax.ShapeDtypeStruct((N, NI), jnp.float32),
        grid_spec=pltpu.PrefetchScalarGridSpec(
            num_scalar_prefetch=0,
            grid=grid,
            in_specs=[
                # ctx_b: constant block index -> fetched once, stays resident.
                pl.BlockSpec((N, E), lambda i: (0, 0)),
                # transposed embedding tile, items on the lane (minor) dim.
                pl.BlockSpec((E, tile), lambda i: (0, i)),
            ],
            out_specs=pl.BlockSpec((N, tile), lambda i: (0, i)),
        ),
        compiler_params=pltpu.CompilerParams(
            # item tiles shard across the 2 TensorCores on v7x; harmless on v5e/v6e
            dimension_semantics=("parallel",),
            vmem_limit_bytes=vmem_limit,
        ),
        cost_estimate=cost,
    )(ctx_b, emb_t)

    if apply_softmax:
        # nn.Softmax() in the module (default config is Identity); plain-JAX glue.
        out = jax.nn.softmax(out, axis=-1)
    return out


if __name__ == "__main__":
    # Small, module-consistent shapes.
    N = 8            # batch size
    H = 32           # encoded_representation_size
    E = 16           # embedding dim
    NI = 256         # vocabulary / number of items

    key = jax.random.PRNGKey(0)
    k_ctx, k_w, k_emb = jax.random.split(key, 3)
    context = jax.random.normal(k_ctx, (N, H), dtype=jnp.float32)
    b_weight = jax.random.normal(k_w, (H, E), dtype=jnp.float32) * 0.1   # Linear(E->H).weight
    emb_weight = jax.random.normal(k_emb, (NI, E), dtype=jnp.float32)    # embedding table

    out = bilinear_decoder(context, b_weight, emb_weight)
    out = jax.block_until_ready(out)

    # Pure-JAX reference mirroring the PyTorch forward.
    embi_b = emb_weight @ b_weight.T          # (NI, H)
    ref = context @ embi_b.T                  # (N, NI)
    assert out.shape == (N, NI)
    assert jnp.allclose(out, ref, atol=1e-4, rtol=1e-4)

    print("KERNEL_OK")
</pallas_src>

<mosaic_0001>
module attributes {stable_mosaic.version = 11 : i64} {
  func.func @_bilinear_decoder_kernel(%arg0: i32, %arg1: memref<8x16xf32, #tpu.memory_space<vmem>>, %arg2: memref<16x256xf32, #tpu.memory_space<vmem>>, %arg3: memref<8x256xf32, #tpu.memory_space<vmem>>) attributes {dimension_semantics = [#tpu.dimension_semantics<parallel>], iteration_bounds = array<i64: 1>, scalar_prefetch = 0 : i64, scratch_operands = 0 : i64, tpu.core_type = #tpu.core_type<tc>, window_params = [{pipeline_mode = #tpu.pipeline_mode<synchronous>, transform_indices = @transform_0, window_bounds = array<i64: 8, 16>}, {transform_indices = @transform_1, window_bounds = array<i64: 16, 256>}, {transform_indices = @transform_2, window_bounds = array<i64: 8, 256>}]} {
    %c0 = arith.constant 0 : index
    %c0_0 = arith.constant 0 : index
    %0 = vector.load %arg1[%c0, %c0_0] : memref<8x16xf32, #tpu.memory_space<vmem>>, vector<8x16xf32>
    %c0_1 = arith.constant 0 : index
    %c0_2 = arith.constant 0 : index
    %1 = vector.load %arg2[%c0_1, %c0_2] : memref<16x256xf32, #tpu.memory_space<vmem>>, vector<16x256xf32>
    %cst = arith.constant dense<0.000000e+00> : vector<8x256xf32>
    %2 = tpu.matmul %0, %1, %cst {dimension_numbers = #tpu.dot_dimension_numbers<[1], [0], [0], [1], [0, 0, 1, 1], [], []>} : vector<8x16xf32>, vector<16x256xf32>, vector<8x256xf32> -> vector<8x256xf32>
    %c0_3 = arith.constant 0 : index
    %c0_4 = arith.constant 0 : index
    %3 = vector.load %arg3[%c0_3, %c0_4] : memref<8x256xf32, #tpu.memory_space<vmem>>, vector<8x256xf32>
    tpu.vector_store %arg3[%c0_3, %c0_4], %2 {strides = array<i32>} : memref<8x256xf32, #tpu.memory_space<vmem>>, vector<8x256xf32>,
    return
  }
  func.func @transform_0(%arg0: i32) -> (i32, i32) {
    %c0_i32 = arith.constant 0 : i32
    %c0_i32_0 = arith.constant 0 : i32
    %c0_i32_1 = arith.constant 0 : i32
    return %c0_i32, %c0_i32_0 : i32, i32
  }
  func.func @transform_1(%arg0: i32) -> (i32, i32) {
    %c0_i32 = arith.constant 0 : i32
    %c0_i32_0 = arith.constant 0 : i32
    return %c0_i32, %arg0 : i32, i32
  }
  func.func @transform_2(%arg0: i32) -> (i32, i32) {
    %c0_i32 = arith.constant 0 : i32
    %c0_i32_0 = arith.constant 0 : i32
    return %c0_i32, %arg0 : i32, i32
  }
}

</mosaic_0001>

<llo_original>
// kernel: tpu_custom_call.1
$region0: #{tpu_custom_call.1}
  #allocation0 [shape = 'u32[]', space=smem, size = 0x4, offset = 0x4, fixed_abs, tag = 'smem constant byte address 0x4 - core index']
  #allocation1 [shape = 'u32[144,128]{1,0:T(1,128)}', space=vmem, size = 0x12000, scoped, tag = 'internal scratch']
  %s0 = inlined_call_operand.hbm [shape: f32[8,16], index: 0, kind: input, shape index: {}]
  %s1 = inlined_call_operand.hbm [shape: f32[16,256], index: 1, kind: input, shape index: {}]
  %s2 = inlined_call_operand.hbm [shape: f32[8,256], index: 2, kind: output, shape index: {}]
  %s3 = sld [smem:[#allocation0]]
  $region26: #{tpu_custom_call.1} parent=0
    _
  %s5 = ssub.s32 1, %s3
  %s6 = scalar_select 0, %s5, %s3
  $region1: #{tpu_custom_call.1} parent=0
    #allocation2 [shape = 'u8[4096]{0}', space=vmem, size = 0x1000, scoped, tag = 'input window, operand 0, single buffered']
    #allocation3 [shape = 's32[1]{0}', space=sflag, size = 0x4, scoped, tag = 'scoped memory for tpu_custom_call.1']
    #allocation4 [shape = 's32[1]{0}', space=sflag, size = 0x4, scoped, tag = 'scoped memory for tpu_custom_call.1']
    #allocation5 [shape = 'u8[16384]{0}', space=vmem, size = 0x4000, scoped, tag = 'input window, operand 1, single buffered']
    #allocation6 [shape = 's32[1]{0}', space=sflag, size = 0x4, scoped, tag = 'scoped memory for tpu_custom_call.1']
    #allocation7 [shape = 'u8[8192]{0}', space=vmem, size = 0x2000, scoped, tag = 'output window, operand 0, single buffered']
    %7 = vsyncpa [#allocation3], 0
    %8 = vsyncpa [#allocation6], 0
    %9 = vsyncpa [#allocation4], 0
    // Predicated region
    $region2: #{tpu_custom_call.1} parent=1 // pred_check
      _
    $region3: #{tpu_custom_call.1} parent=1 // pred_check_branch
      %11 = sbr.rel (0) target = $region5
    $region4: #{tpu_custom_call.1} parent=1 // pred_region
      %s13 = ssub.s32 128, 128
      %14 = vsyncadd [#allocation3], %s13
      %s16 = sshll.u32 [#allocation2], 4
      %s17 = int_to_ptr.vmem [resolvable:$true] %s16
      %19 = dma.hbm_to_vmem [thread:$0]  %s0, 128, %s17, [#allocation3]
    $region5: #{tpu_custom_call.1} parent=1 // pred_fallthru
      _
    // Predicated region
    $region6: #{tpu_custom_call.1} parent=1 // pred_check
      _
    $region7: #{tpu_custom_call.1} parent=1 // pred_check_branch
      %21 = sbr.rel (0) target = $region9
    $region8: #{tpu_custom_call.1} parent=1 // pred_region
      %s23 = ssub.s32 512, 512
      %24 = vsyncadd [#allocation6], %s23
      %s25 = sshll.u32 [#allocation5], 4
      %s26 = int_to_ptr.vmem [resolvable:$true] %s25
      %31 = dma.hbm_to_vmem [thread:$0]  %s1, 512, %s26, [#allocation6], 256, 256, 16
    $region9: #{tpu_custom_call.1} parent=1 // pred_fallthru
      _
    // Predicated region
    $region10: #{tpu_custom_call.1} parent=1 // pred_check
      _
    $region11: #{tpu_custom_call.1} parent=1 // pred_check_branch
      %33 = sbr.rel (0) target = $region13
    $region12: #{tpu_custom_call.1} parent=1 // pred_region
      %34 = dma.done [#allocation3], 128
    $region13: #{tpu_custom_call.1} parent=1 // pred_fallthru
      _
    // Predicated region
    $region14: #{tpu_custom_call.1} parent=1 // pred_check
      _
    $region15: #{tpu_custom_call.1} parent=1 // pred_check_branch
      %36 = sbr.rel (0) target = $region17
    $region16: #{tpu_custom_call.1} parent=1 // pred_region
      %37 = dma.done [#allocation6], 512
    $region17: #{tpu_custom_call.1} parent=1 // pred_fallthru
      _
    %v38 = vld [vmem:[#allocation2] sm:$0xff]
    %v39 = vld [vmem:[#allocation5] sm:$0xff]
    %v40 = vld [vmem:[#allocation5 + $0x8] sm:$0xff]
    %v41 = vld [vmem:[#allocation5 + $0x10] sm:$0xff]
    %v42 = vld [vmem:[#allocation5 + $0x18] sm:$0xff]
    %vm43 = vcmask 130048
    %v45 = vsel %vm43, %v38, 0
    %47 = vmatprep.subr.mxu0 0.0
    %48 = vmatpush1.msra.mxu0 0.0
    %49 = vmatprep.subr.mxu0 0.0
    %50 = vmatpush1.msra.mxu0 0.0
    %51 = vmatprep.subr.mxu0 0.0
    %52 = vmatpush1.msra.mxu0 0.0
    %53 = vmatprep.subr.mxu0 0.0
    %54 = vmatpush1.msra.mxu0 0.0
    %55 = vmatprep.subr.mxu0 0.0
    %56 = vmatpush1.msra.mxu0 0.0
    %57 = vmatprep.subr.mxu0 0.0
    %58 = vmatpush1.msra.mxu0 0.0
    %59 = vmatprep.subr.mxu0 0.0
    %60 = vmatpush1.msra.mxu0 0.0
    %61 = vmatprep.subr.mxu0 0.0
    %62 = vmatpush1.msra.mxu0 0.0
    %63 = vmatprep.subr.mxu0 0.0
    %64 = vmatpush1.msra.mxu0 0.0
    %65 = vmatprep.subr.mxu0 0.0
    %66 = vmatpush1.msra.mxu0 0.0
    %67 = vmatprep.subr.mxu0 0.0
    %68 = vmatpush1.msra.mxu0 0.0
    %69 = vmatprep.subr.mxu0 0.0
    %70 = vmatpush1.msra.mxu0 0.0
    %71 = vmatprep.subr.mxu0 0.0
    %72 = vmatpush1.msra.mxu0 0.0
    %73 = vmatprep.subr.mxu0 0.0
    %74 = vmatpush1.msra.mxu0 0.0
    %75 = vmatprep.subr.mxu0 %v42
    %76 = vmatpush1.msra.mxu0 %v41
    %77 = vmatprep.subr.mxu0 %v40
    %78 = vmatpush1.msra.mxu0 %v39
    %79 = vmatprep.subr.mxu0 0.0
    %80 = vmatpush2.msra.mxu0 0.0
    %81 = vmatprep.subr.mxu0 0.0
    %82 = vmatpush2.msra.mxu0 0.0
    %83 = vmatprep.subr.mxu0 0.0
    %84 = vmatpush2.msra.mxu0 0.0
    %85 = vmatprep.subr.mxu0 0.0
    %86 = vmatpush2.msra.mxu0 0.0
    %87 = vmatprep.subr.mxu0 0.0
    %88 = vmatpush2.msra.mxu0 0.0
    %89 = vmatprep.subr.mxu0 0.0
    %90 = vmatpush2.msra.mxu0 0.0
    %91 = vmatprep.subr.mxu0 0.0
    %92 = vmatpush2.msra.mxu0 0.0
    %93 = vmatprep.subr.mxu0 0.0
    %94 = vmatpush2.msra.mxu0 0.0
    %95 = vmatprep.subr.mxu0 0.0
    %96 = vmatpush2.msra.mxu0 0.0
    %97 = vmatprep.subr.mxu0 0.0
    %98 = vmatpush2.msra.mxu0 0.0
    %99 = vmatprep.subr.mxu0 0.0
    %100 = vmatpush2.msra.mxu0 0.0
    %101 = vmatprep.subr.mxu0 0.0
    %102 = vmatpush2.msra.mxu0 0.0
    %103 = vmatprep.subr.mxu0 0.0
    %104 = vmatpush2.msra.mxu0 0.0
    %105 = vmatprep.subr.mxu0 0.0
    %106 = vmatpush2.msra.mxu0 0.0
    %107 = vmatprep.subr.mxu0 0.0
    %108 = vmatpush2.msra.mxu0 0.0
    %109 = vmatprep.subr.mxu0 0.0
    %110 = vmatpush2.msra.mxu0 0.0
    %111 = vmatprep.mubr.f32.mxu0 0.0
    %112 = vmatmul.mubr.f32.gmra.mxu0 %v45
    %v113 = vpop.f32.mrf.mxu0
    %v114 = vadd.f32 0.0, %v113
    %v115 = vpop.f32.mrf.mxu0
    %v116 = vadd.f32 0.0, %v115
    %117 = vdwg.mxu0
    %118 = vst [vmem:[#allocation7] sm:$0xff] %v114
    %119 = vst [vmem:[#allocation7 + $0x8] sm:$0xff] %v116
    // Predicated region
    $region18: #{tpu_custom_call.1} parent=1 // pred_check
      _
    $region19: #{tpu_custom_call.1} parent=1 // pred_check_branch
      %121 = sbr.rel (0) target = $region21
    $region20: #{tpu_custom_call.1} parent=1 // pred_region
      %s123 = ssub.s32 256, 256
      %124 = vsyncadd [#allocation4], %s123
      %s126 = sshll.u32 [#allocation7], 4
      %s127 = int_to_ptr.vmem [resolvable:$true] %s126
      %129 = dma.vmem_to_hbm [thread:$0]  %s127, 256, %s2, [#allocation4]
    $region21: #{tpu_custom_call.1} parent=1 // pred_fallthru
      _
    // Predicated region
    $region22: #{tpu_custom_call.1} parent=1 // pred_check
      _
    $region23: #{tpu_custom_call.1} parent=1 // pred_check_branch
      %131 = sbr.rel (0) target = $region25
    $region24: #{tpu_custom_call.1} parent=1 // pred_region
      %132 = dma.done [#allocation4], 256
    $region25: #{tpu_custom_call.1} parent=1 // pred_fallthru
      _
    %133 = vsyncpa [#allocation3], 1
    %134 = vsyncpa [#allocation6], 1
    %135 = vsyncpa [#allocation4], 1

</llo_original>
